<compile_context>
chip_gen: v5e
topology: v5e:2x2
jax: 0.10.0
libtpu: 0.0.40
codegen_flags: <defaults>
</compile_context>

<pallas_src>
import functools

import jax
import jax.numpy as jnp
import numpy as np
from jax.experimental import pallas as pl
from jax.experimental.pallas import tpu as pltpu


def _temporal_block_kernel(*refs, k, dilation, has_carry, has_down):
    """Fused TemporalBlock for one (batch element, L tile).

    refs (in order):
      x_ref   : (1, C_in, lt)      input tile (f32 first layer, bf16 after)
      w1_ref  : (k, C_out, C_in)   bf16 per-tap conv1 weights
      b1_ref  : (C_out, 1)         f32
      w2_ref  : (k, C_out, C_out)  bf16 per-tap conv2 weights
      b2_ref  : (C_out, 1)         f32
      [wd_ref : (C_out, C_in) bf16, bd_ref: (C_out, 1) f32]  if C_in != C_out
      o_ref   : (1, C_out, lt)     output tile (bf16 inter-layer, f32 last)
      [xe_ref : (C_in, 2p + lt) bf16 scratch]                if p > 0
      [carry_ref: (C_in, 2p) x.dtype scratch]                if tiled along L
    """
    p = (k - 1) * dilation            # per-conv causal receptive field
    two_p = 2 * p                     # fused-block halo (conv1 + conv2)

    it = iter(refs)
    x_ref = next(it)
    w1_ref, b1_ref, w2_ref, b2_ref = next(it), next(it), next(it), next(it)
    wd_ref, bd_ref = (next(it), next(it)) if has_down else (None, None)
    o_ref = next(it)
    xe_ref = next(it) if two_p > 0 else None
    carry_ref = next(it) if has_carry else None

    l_id = pl.program_id(1)
    c_in = x_ref.shape[1]
    lt = x_ref.shape[2]

    x_in = x_ref[0]                                   # (c_in, lt), input dtype
    xc = x_in.astype(jnp.bfloat16)

    # ---- Stage x + its causal left halo (2p cols) into the bf16 scratch. ----
    # The halo is carried across consecutive L tiles in a tiny VMEM scratch
    # (no duplicate HBM fetch of the previous tile); it is zero on each
    # batch element's first tile.
    if two_p > 0:
        if has_carry:
            @pl.when(l_id == 0)
            def _():
                carry_ref[...] = jnp.zeros_like(carry_ref)
            xe_ref[:, :two_p] = carry_ref[...].astype(jnp.bfloat16)
            carry_ref[...] = x_in[:, lt - two_p:]     # tail for the next tile
        else:
            xe_ref[:, :two_p] = jnp.zeros((c_in, two_p), jnp.bfloat16)
        xe_ref[:, two_p:] = xc

    def conv1_tap(j):
        if two_p > 0:
            return xe_ref[:, j * dilation:j * dilation + p + lt]
        return xc                                     # k == 1: no halo needed

    # ---- conv1 + bias + ReLU over output positions [t0 - p, t0 + lt). -------
    # k per-tap MXU matmuls accumulated in f32 (no im2col scratch round-trip).
    acc1 = jnp.dot(w1_ref[0], conv1_tap(0), preferred_element_type=jnp.float32)
    for j in range(1, k):
        acc1 = acc1 + jnp.dot(w1_ref[j], conv1_tap(j),
                              preferred_element_type=jnp.float32)
    out1 = jnp.maximum(acc1 + b1_ref[...], 0.0)       # (c_out, p + lt) f32

    # out1 columns that sit before t = 0 are conv2's ZERO padding, not
    # relu(bias): zero them on the first L tile.
    if p > 0:
        cols = jax.lax.broadcasted_iota(jnp.int32, out1.shape, 1)
        keep = cols >= p
        if has_carry:
            keep = jnp.logical_or(l_id > 0, keep)
        out1 = jnp.where(keep, out1, 0.0)

    # ---- conv2 + bias + ReLU (per-tap accumulation; out1 stays in vregs). ---
    out1_b = out1.astype(jnp.bfloat16)
    acc2 = jnp.dot(w2_ref[0], out1_b[:, :lt], preferred_element_type=jnp.float32)
    for j in range(1, k):
        acc2 = acc2 + jnp.dot(w2_ref[j],
                              out1_b[:, j * dilation:j * dilation + lt],
                              preferred_element_type=jnp.float32)
    out2 = jnp.maximum(acc2 + b2_ref[...], 0.0)       # (c_out, lt) f32

    # ---- residual + final ReLU ----------------------------------------------
    if has_down:
        res = jnp.dot(wd_ref[...], xc,
                      preferred_element_type=jnp.float32) + bd_ref[...]
    else:
        res = x_in.astype(jnp.float32)                # identity pass-through
    o_ref[0] = jnp.maximum(out2 + res, 0.0).astype(o_ref.dtype)


def _plan_tiling(seq_len, layer_dims, kernel_size,
                 budget_bytes=10 * 1024 * 1024, force_lt=None):
    """Pick one L-tile size shared by every layer (None => single full-L tile).

    The per-step VMEM estimate covers double-buffered IO blocks, the bf16
    staging scratch, the f32 conv intermediates (vregs / compiler spill), the
    halo-carry scratch and the (tiny) weights.  The 10 MiB default stays inside
    v5e's 16 MiB scoped-VMEM default; v6e/v7x (32 MiB scoped) get headroom
    without touching vmem_limit_bytes.
    """
    if force_lt is not None:
        return force_lt

    def est(lt, halo, c_in, c_out, in_b, out_b):
        p = halo // 2
        return (2 * c_in * lt * in_b                 # input block, double-buffered
                + 2 * c_out * lt * out_b             # output block, double-buffered
                + 2 * c_in * (halo + lt)             # bf16 staging scratch
                + 4 * c_out * (p + lt)               # out1 (f32)
                + 8 * c_out * lt                     # out2 + residual (f32)
                + c_in * halo * in_b                 # halo carry scratch
                + 4 * kernel_size * c_out * (c_in + c_out))   # bf16 weights x2

    halos = [2 * (kernel_size - 1) * d for (_, _, d, _, _) in layer_dims]
    # Prefer a single full-L tile when it fits: no halo/carry logic at all.
    if all(est(seq_len, h, ci, co, ib, ob) <= budget_bytes
           for (ci, co, _, ib, ob), h in zip(layer_dims, halos)):
        return None
    max_halo = max(halos)
    for lt in (2048, 1024, 512, 256, 128):
        if lt < max_halo:
            continue
        if all(est(lt, h, ci, co, ib, ob) <= budget_bytes
               for (ci, co, _, ib, ob), h in zip(layer_dims, halos)):
            return lt
    return max(128, -(-max_halo // 128) * 128)        # best effort


def temporal_block(x, params, kernel_size, dilation, lt, out_dtype):
    """x: (N, C_in, L) -> (N, C_out, L): one fused TemporalBlock pallas_call."""
    wt1, b1, wt2, b2, wd, bd = params
    n, c_in, seq_len = x.shape
    c_out = wt1.shape[1]
    p = (kernel_size - 1) * dilation
    two_p = 2 * p
    assert seq_len % lt == 0, (seq_len, lt)
    num_l = seq_len // lt
    has_carry = num_l > 1 and two_p > 0
    has_down = wd is not None
    if has_carry:
        assert lt >= two_p, (lt, two_p)   # halo must fit in one previous tile

    kern = functools.partial(_temporal_block_kernel, k=kernel_size,
                             dilation=dilation, has_carry=has_carry,
                             has_down=has_down)

    in_specs = [
        pl.BlockSpec((1, c_in, lt), lambda i, l: (i, 0, l)),
        pl.BlockSpec((kernel_size, c_out, c_in), lambda i, l: (0, 0, 0)),
        pl.BlockSpec((c_out, 1), lambda i, l: (0, 0)),
        pl.BlockSpec((kernel_size, c_out, c_out), lambda i, l: (0, 0, 0)),
        pl.BlockSpec((c_out, 1), lambda i, l: (0, 0)),
    ]
    args = [x, wt1, b1, wt2, b2]
    if has_down:
        in_specs += [pl.BlockSpec((c_out, c_in), lambda i, l: (0, 0)),
                     pl.BlockSpec((c_out, 1), lambda i, l: (0, 0))]
        args += [wd, bd]

    scratch_shapes = []
    if two_p > 0:
        scratch_shapes.append(pltpu.VMEM((c_in, two_p + lt), jnp.bfloat16))
    if has_carry:
        scratch_shapes.append(pltpu.VMEM((c_in, two_p), x.dtype))

    return pl.pallas_call(
        kern,
        out_shape=jax.ShapeDtypeStruct((n, c_out, seq_len), out_dtype),
        grid=(n, num_l),
        in_specs=in_specs,
        out_specs=pl.BlockSpec((1, c_out, lt), lambda i, l: (i, 0, l)),
        scratch_shapes=scratch_shapes,
        compiler_params=pltpu.CompilerParams(
            # Batch axis feeds v7x's two TensorCores; the L axis must stay
            # sequential ("arbitrary") because the causal halo is carried
            # between consecutive L tiles in a VMEM scratch.
            dimension_semantics=("parallel", "arbitrary")),
    )(*args)


def init_tcn_params(key, num_inputs, num_channels, kernel_size):
    """PyTorch-style Conv1d init; weights stored per-tap (k, C_out, C_in) bf16."""
    params = []
    for i, c_out in enumerate(num_channels):
        c_in = num_inputs if i == 0 else num_channels[i - 1]
        key, k1, k2, k3, k4, k5, k6 = jax.random.split(key, 7)
        s1 = 1.0 / np.sqrt(c_in * kernel_size)
        w1 = jax.random.uniform(k1, (c_out, c_in, kernel_size), jnp.float32, -s1, s1)
        b1 = jax.random.uniform(k2, (c_out, 1), jnp.float32, -s1, s1)
        s2 = 1.0 / np.sqrt(c_out * kernel_size)
        w2 = jax.random.uniform(k3, (c_out, c_out, kernel_size), jnp.float32, -s2, s2)
        b2 = jax.random.uniform(k4, (c_out, 1), jnp.float32, -s2, s2)
        # (C_out, C_in, k) -> (k, C_out, C_in): wt[j] is the tap-j matrix W_j.
        wt1 = jnp.transpose(w1, (2, 0, 1)).astype(jnp.bfloat16)
        wt2 = jnp.transpose(w2, (2, 0, 1)).astype(jnp.bfloat16)
        if c_in != c_out:
            sd = 1.0 / np.sqrt(c_in)
            wd = jax.random.uniform(k5, (c_out, c_in), jnp.float32,
                                    -sd, sd).astype(jnp.bfloat16)
            bd = jax.random.uniform(k6, (c_out, 1), jnp.float32, -sd, sd)
        else:
            wd, bd = None, None   # identity residual: exact pass-through in-kernel
        params.append((wt1, b1, wt2, b2, wd, bd))
    return params


def tcn_forward(x, params, kernel_size, force_lt=None):
    """TCN forward pass: a chain of fused TemporalBlock pallas_calls.

    Inter-layer activations are stored in bf16 (halves layer-boundary HBM
    traffic); only the final block writes f32.  L is padded once to a tile
    multiple (exact for a causal conv) and sliced back at the end.
    """
    _, _, seq_len = x.shape
    num_levels = len(params)
    dims = []
    c_prev = x.shape[1]
    for i, prm in enumerate(params):
        c_out = prm[0].shape[1]
        dims.append((c_prev, c_out, 2 ** i,
                     4 if i == 0 else 2, 4 if i == num_levels - 1 else 2))
        c_prev = c_out
    lt = _plan_tiling(seq_len, dims, kernel_size, force_lt=force_lt)

    if lt is None:
        run_len, x_run = seq_len, x
    else:
        run_len = -(-seq_len // lt) * lt
        x_run = (jnp.pad(x, ((0, 0), (0, 0), (0, run_len - seq_len)))
                 if run_len != seq_len else x)

    for i, prm in enumerate(params):
        out_dtype = jnp.float32 if i == num_levels - 1 else jnp.bfloat16
        x_run = temporal_block(x_run, prm, kernel_size, 2 ** i,
                               lt=run_len if lt is None else lt,
                               out_dtype=out_dtype)
    return x_run[:, :, :seq_len] if run_len != seq_len else x_run


# ----------------------------- pure-JAX reference -----------------------------
def _ref_temporal_block(x, params, k, d):
    wt1, b1, wt2, b2, wd, bd = params

    def causal_conv(inp, wt, b):
        seq = inp.shape[-1]
        w = wt.astype(jnp.float32)                    # (k, c_out, c_in)
        out = jnp.zeros((inp.shape[0], w.shape[1], seq), jnp.float32)
        for j in range(k):
            shift = (k - 1 - j) * d
            xs = jnp.pad(inp, ((0, 0), (0, 0), (shift, 0)))[:, :, :seq]
            out = out + jnp.einsum("oc,ncl->nol", w[j], xs)
        return out + b[None]

    o1 = jnp.maximum(causal_conv(x, wt1, b1), 0.0)
    o2 = jnp.maximum(causal_conv(o1, wt2, b2), 0.0)
    if wd is None:
        res = x
    else:
        res = jnp.einsum("oc,ncl->nol", wd.astype(jnp.float32), x) + bd[None]
    return jnp.maximum(o2 + res, 0.0)


def tcn_forward_ref(x, params, kernel_size):
    for i, prm in enumerate(params):
        x = _ref_temporal_block(x, prm, kernel_size, 2 ** i)
    return x


if __name__ == "__main__":
    key = jax.random.PRNGKey(0)
    k_x, k_p, k_x2, k_p2 = jax.random.split(key, 4)

    # ---- small demo (single full-L tile, no halo logic) ----------------------
    num_inputs = 4
    num_channels = [8, 16, 16]   # exercises both the 1x1 downsample and identity
    kernel_size = 2
    batch, seq_len = 2, 16

    x = jax.random.normal(k_x, (batch, num_inputs, seq_len), jnp.float32)
    params = init_tcn_params(k_p, num_inputs, num_channels, kernel_size)

    out = jax.block_until_ready(tcn_forward(x, params, kernel_size))
    assert out.shape == (batch, num_channels[-1], seq_len), out.shape
    assert out.dtype == jnp.float32
    assert bool(jnp.all(jnp.isfinite(out)))
    assert bool(jnp.all(out >= 0.0))          # final ReLU

    # f32 reference (kernel uses bf16 MXU operands / bf16 inter-layer
    # activations with f32 accumulation).
    ref = tcn_forward_ref(x, params, kernel_size)
    assert bool(jnp.allclose(out, ref, rtol=5e-2, atol=5e-2)), (
        float(jnp.max(jnp.abs(out - ref))))

    # ---- tiled path: carried halo + non-divisible L padding ------------------
    num_channels2 = [8, 8]
    batch2, seq_len2 = 2, 250                 # pads to 256 -> two 128-wide tiles
    x2 = jax.random.normal(k_x2, (batch2, num_inputs, seq_len2), jnp.float32)
    params2 = init_tcn_params(k_p2, num_inputs, num_channels2, kernel_size)

    out2 = jax.block_until_ready(
        tcn_forward(x2, params2, kernel_size, force_lt=128))
    ref2 = tcn_forward_ref(x2, params2, kernel_size)
    assert out2.shape == ref2.shape, (out2.shape, ref2.shape)
    assert bool(jnp.allclose(out2, ref2, rtol=5e-2, atol=5e-2)), (
        float(jnp.max(jnp.abs(out2 - ref2))))

    print("KERNEL_OK")
</pallas_src>

<mosaic_0001>
module attributes {stable_mosaic.version = 11 : i64} {
  func.func @_temporal_block_kernel(%arg0: i32, %arg1: i32, %arg2: memref<1x4x16xf32, #tpu.memory_space<vmem>>, %arg3: memref<2x8x4xbf16, #tpu.memory_space<vmem>>, %arg4: memref<8x1xf32, #tpu.memory_space<vmem>>, %arg5: memref<2x8x8xbf16, #tpu.memory_space<vmem>>, %arg6: memref<8x1xf32, #tpu.memory_space<vmem>>, %arg7: memref<8x4xbf16, #tpu.memory_space<vmem>>, %arg8: memref<8x1xf32, #tpu.memory_space<vmem>>, %arg9: memref<1x8x16xbf16, #tpu.memory_space<vmem>>, %arg10: memref<4x18xbf16, #tpu.memory_space<vmem>>) attributes {dimension_semantics = [#tpu.dimension_semantics<parallel>, #tpu.dimension_semantics<arbitrary>], iteration_bounds = array<i64: 2, 1>, scalar_prefetch = 0 : i64, scratch_operands = 1 : i64, tpu.core_type = #tpu.core_type<tc>, window_params = [{transform_indices = @transform_0, window_bounds = array<i64: 1, 4, 16>}, {pipeline_mode = #tpu.pipeline_mode<synchronous>, transform_indices = @transform_1, window_bounds = array<i64: 2, 8, 4>}, {pipeline_mode = #tpu.pipeline_mode<synchronous>, transform_indices = @transform_2, window_bounds = array<i64: 8, 1>}, {pipeline_mode = #tpu.pipeline_mode<synchronous>, transform_indices = @transform_3, window_bounds = array<i64: 2, 8, 8>}, {pipeline_mode = #tpu.pipeline_mode<synchronous>, transform_indices = @transform_4, window_bounds = array<i64: 8, 1>}, {pipeline_mode = #tpu.pipeline_mode<synchronous>, transform_indices = @transform_5, window_bounds = array<i64: 8, 4>}, {pipeline_mode = #tpu.pipeline_mode<synchronous>, transform_indices = @transform_6, window_bounds = array<i64: 8, 1>}, {transform_indices = @transform_7, window_bounds = array<i64: 1, 8, 16>}]} {
    %c0 = arith.constant 0 : index
    %c0_0 = arith.constant 0 : index
    %c0_1 = arith.constant 0 : index
    %0 = vector.load %arg2[%c0, %c0_0, %c0_1] : memref<1x4x16xf32, #tpu.memory_space<vmem>>, vector<1x4x16xf32>
    %1 = vector.shape_cast %0 : vector<1x4x16xf32> to vector<4x16xf32>
    %2 = arith.truncf %1 : vector<4x16xf32> to vector<4x16xbf16>
    %cst = arith.constant 0.000000e+00 : bf16
    %3 = vector.broadcast %cst : bf16 to vector<4x2xbf16>
    %c0_2 = arith.constant 0 : index
    %c0_3 = arith.constant 0 : index
    %4 = vector.load %arg10[%c0_2, %c0_3] : memref<4x18xbf16, #tpu.memory_space<vmem>>, vector<4x2xbf16>
    tpu.vector_store %arg10[%c0_2, %c0_3], %3 {strides = array<i32>} : memref<4x18xbf16, #tpu.memory_space<vmem>>, vector<4x2xbf16>,
    %c0_4 = arith.constant 0 : index
    %c2 = arith.constant 2 : index
    %5 = vector.load %arg10[%c0_4, %c2] : memref<4x18xbf16, #tpu.memory_space<vmem>>, vector<4x16xbf16>
    tpu.vector_store %arg10[%c0_4, %c2], %2 {strides = array<i32>} : memref<4x18xbf16, #tpu.memory_space<vmem>>, vector<4x16xbf16>,
    %c0_5 = arith.constant 0 : index
    %c0_6 = arith.constant 0 : index
    %c0_7 = arith.constant 0 : index
    %6 = vector.load %arg3[%c0_5, %c0_6, %c0_7] : memref<2x8x4xbf16, #tpu.memory_space<vmem>>, vector<1x8x4xbf16>
    %7 = vector.shape_cast %6 : vector<1x8x4xbf16> to vector<8x4xbf16>
    %c0_8 = arith.constant 0 : index
    %c0_9 = arith.constant 0 : index
    %8 = vector.load %arg10[%c0_8, %c0_9] : memref<4x18xbf16, #tpu.memory_space<vmem>>, vector<4x17xbf16>
    %cst_10 = arith.constant dense<0.000000e+00> : vector<8x17xf32>
    %9 = tpu.matmul %7, %8, %cst_10 {dimension_numbers = #tpu.dot_dimension_numbers<[1], [0], [0], [1], [0, 0, 1, 1], [], []>} : vector<8x4xbf16>, vector<4x17xbf16>, vector<8x17xf32> -> vector<8x17xf32>
    %c1 = arith.constant 1 : index
    %c0_11 = arith.constant 0 : index
    %c0_12 = arith.constant 0 : index
    %10 = vector.load %arg3[%c1, %c0_11, %c0_12] : memref<2x8x4xbf16, #tpu.memory_space<vmem>>, vector<1x8x4xbf16>
    %11 = vector.shape_cast %10 : vector<1x8x4xbf16> to vector<8x4xbf16>
    %c0_13 = arith.constant 0 : index
    %c1_14 = arith.constant 1 : index
    %12 = vector.load %arg10[%c0_13, %c1_14] : memref<4x18xbf16, #tpu.memory_space<vmem>>, vector<4x17xbf16>
    %cst_15 = arith.constant dense<0.000000e+00> : vector<8x17xf32>
    %13 = tpu.matmul %11, %12, %cst_15 {dimension_numbers = #tpu.dot_dimension_numbers<[1], [0], [0], [1], [0, 0, 1, 1], [], []>} : vector<8x4xbf16>, vector<4x17xbf16>, vector<8x17xf32> -> vector<8x17xf32>
    %14 = arith.addf %9, %13 : vector<8x17xf32>
    %c0_16 = arith.constant 0 : index
    %c0_17 = arith.constant 0 : index
    %15 = vector.load %arg4[%c0_16, %c0_17] : memref<8x1xf32, #tpu.memory_space<vmem>>, vector<8x1xf32>
    %16 = vector.broadcast %15 : vector<8x1xf32> to vector<8x17xf32>
    %17 = arith.addf %14, %16 : vector<8x17xf32>
    %cst_18 = arith.constant 0.000000e+00 : f32
    %18 = vector.broadcast %cst_18 : f32 to vector<8x17xf32>
    %19 = arith.maximumf %17, %18 : vector<8x17xf32>
    %20 = tpu.iota {dimensions = array<i32: 1>} : vector<8x17xi32>
    %c1_i32 = arith.constant 1 : i32
    %21 = vector.broadcast %c1_i32 : i32 to vector<8x17xi32>
    %22 = arith.cmpi sge, %20, %21 : vector<8x17xi32>
    %cst_19 = arith.constant 0.000000e+00 : f32
    %23 = vector.broadcast %cst_19 : f32 to vector<8x17xf32>
    %24 = arith.select %22, %19, %23 : vector<8x17xi1>, vector<8x17xf32>
    %25 = arith.truncf %24 : vector<8x17xf32> to vector<8x17xbf16>
    %c0_20 = arith.constant 0 : index
    %c0_21 = arith.constant 0 : index
    %c0_22 = arith.constant 0 : index
    %26 = vector.load %arg5[%c0_20, %c0_21, %c0_22] : memref<2x8x8xbf16, #tpu.memory_space<vmem>>, vector<1x8x8xbf16>
    %27 = vector.shape_cast %26 : vector<1x8x8xbf16> to vector<8x8xbf16>
    %28 = vector.extract_strided_slice %25 {offsets = [0, 0], sizes = [8, 16], strides = [1, 1]} : vector<8x17xbf16> to vector<8x16xbf16>
    %cst_23 = arith.constant dense<0.000000e+00> : vector<8x16xf32>
    %29 = tpu.matmul %27, %28, %cst_23 {dimension_numbers = #tpu.dot_dimension_numbers<[1], [0], [0], [1], [0, 0, 1, 1], [], []>} : vector<8x8xbf16>, vector<8x16xbf16>, vector<8x16xf32> -> vector<8x16xf32>
    %c1_24 = arith.constant 1 : index
    %c0_25 = arith.constant 0 : index
    %c0_26 = arith.constant 0 : index
    %30 = vector.load %arg5[%c1_24, %c0_25, %c0_26] : memref<2x8x8xbf16, #tpu.memory_space<vmem>>, vector<1x8x8xbf16>
    %31 = vector.shape_cast %30 : vector<1x8x8xbf16> to vector<8x8xbf16>
    %32 = vector.extract_strided_slice %25 {offsets = [0, 1], sizes = [8, 16], strides = [1, 1]} : vector<8x17xbf16> to vector<8x16xbf16>
    %cst_27 = arith.constant dense<0.000000e+00> : vector<8x16xf32>
    %33 = tpu.matmul %31, %32, %cst_27 {dimension_numbers = #tpu.dot_dimension_numbers<[1], [0], [0], [1], [0, 0, 1, 1], [], []>} : vector<8x8xbf16>, vector<8x16xbf16>, vector<8x16xf32> -> vector<8x16xf32>
    %34 = arith.addf %29, %33 : vector<8x16xf32>
    %c0_28 = arith.constant 0 : index
    %c0_29 = arith.constant 0 : index
    %35 = vector.load %arg6[%c0_28, %c0_29] : memref<8x1xf32, #tpu.memory_space<vmem>>, vector<8x1xf32>
    %36 = vector.broadcast %35 : vector<8x1xf32> to vector<8x16xf32>
    %37 = arith.addf %34, %36 : vector<8x16xf32>
    %cst_30 = arith.constant 0.000000e+00 : f32
    %38 = vector.broadcast %cst_30 : f32 to vector<8x16xf32>
    %39 = arith.maximumf %37, %38 : vector<8x16xf32>
    %c0_31 = arith.constant 0 : index
    %c0_32 = arith.constant 0 : index
    %40 = vector.load %arg7[%c0_31, %c0_32] : memref<8x4xbf16, #tpu.memory_space<vmem>>, vector<8x4xbf16>
    %cst_33 = arith.constant dense<0.000000e+00> : vector<8x16xf32>
    %41 = tpu.matmul %40, %2, %cst_33 {dimension_numbers = #tpu.dot_dimension_numbers<[1], [0], [0], [1], [0, 0, 1, 1], [], []>} : vector<8x4xbf16>, vector<4x16xbf16>, vector<8x16xf32> -> vector<8x16xf32>
    %c0_34 = arith.constant 0 : index
    %c0_35 = arith.constant 0 : index
    %42 = vector.load %arg8[%c0_34, %c0_35] : memref<8x1xf32, #tpu.memory_space<vmem>>, vector<8x1xf32>
    %43 = vector.broadcast %42 : vector<8x1xf32> to vector<8x16xf32>
    %44 = arith.addf %41, %43 : vector<8x16xf32>
    %45 = arith.addf %39, %44 : vector<8x16xf32>
    %cst_36 = arith.constant 0.000000e+00 : f32
    %46 = vector.broadcast %cst_36 : f32 to vector<8x16xf32>
    %47 = arith.maximumf %45, %46 : vector<8x16xf32>
    %48 = arith.truncf %47 : vector<8x16xf32> to vector<8x16xbf16>
    %c0_37 = arith.constant 0 : index
    %c0_38 = arith.constant 0 : index
    %c0_39 = arith.constant 0 : index
    %49 = vector.load %arg9[%c0_37, %c0_38, %c0_39] : memref<1x8x16xbf16, #tpu.memory_space<vmem>>, vector<1x8x16xbf16>
    %50 = vector.shape_cast %49 : vector<1x8x16xbf16> to vector<8x16xbf16>
    %51 = vector.shape_cast %48 : vector<8x16xbf16> to vector<1x8x16xbf16>
    tpu.vector_store %arg9[%c0_37, %c0_38, %c0_39], %51 {strides = array<i32>} : memref<1x8x16xbf16, #tpu.memory_space<vmem>>, vector<1x8x16xbf16>,
    return
  }
  func.func @transform_0(%arg0: i32, %arg1: i32) -> (i32, i32, i32) {
    %c0_i32 = arith.constant 0 : i32
    %c0_i32_0 = arith.constant 0 : i32
    return %arg0, %c0_i32, %arg1 : i32, i32, i32
  }
  func.func @transform_1(%arg0: i32, %arg1: i32) -> (i32, i32, i32) {
    %c0_i32 = arith.constant 0 : i32
    %c0_i32_0 = arith.constant 0 : i32
    %c0_i32_1 = arith.constant 0 : i32
    %c0_i32_2 = arith.constant 0 : i32
    return %c0_i32, %c0_i32_0, %c0_i32_1 : i32, i32, i32
  }
  func.func @transform_2(%arg0: i32, %arg1: i32) -> (i32, i32) {
    %c0_i32 = arith.constant 0 : i32
    %c0_i32_0 = arith.constant 0 : i32
    %c0_i32_1 = arith.constant 0 : i32
    return %c0_i32, %c0_i32_0 : i32, i32
  }
  func.func @transform_3(%arg0: i32, %arg1: i32) -> (i32, i32, i32) {
    %c0_i32 = arith.constant 0 : i32
    %c0_i32_0 = arith.constant 0 : i32
    %c0_i32_1 = arith.constant 0 : i32
    %c0_i32_2 = arith.constant 0 : i32
    return %c0_i32, %c0_i32_0, %c0_i32_1 : i32, i32, i32
  }
  func.func @transform_4(%arg0: i32, %arg1: i32) -> (i32, i32) {
    %c0_i32 = arith.constant 0 : i32
    %c0_i32_0 = arith.constant 0 : i32
    %c0_i32_1 = arith.constant 0 : i32
    return %c0_i32, %c0_i32_0 : i32, i32
  }
  func.func @transform_5(%arg0: i32, %arg1: i32) -> (i32, i32) {
    %c0_i32 = arith.constant 0 : i32
    %c0_i32_0 = arith.constant 0 : i32
    %c0_i32_1 = arith.constant 0 : i32
    return %c0_i32, %c0_i32_0 : i32, i32
  }
  func.func @transform_6(%arg0: i32, %arg1: i32) -> (i32, i32) {
    %c0_i32 = arith.constant 0 : i32
    %c0_i32_0 = arith.constant 0 : i32
    %c0_i32_1 = arith.constant 0 : i32
    return %c0_i32, %c0_i32_0 : i32, i32
  }
  func.func @transform_7(%arg0: i32, %arg1: i32) -> (i32, i32, i32) {
    %c0_i32 = arith.constant 0 : i32
    %c0_i32_0 = arith.constant 0 : i32
    return %arg0, %c0_i32, %arg1 : i32, i32, i32
  }
}

</mosaic_0001>

<llo_original>
// kernel: tpu_custom_call.1
$region0: #{tpu_custom_call.1}
  #allocation0 [shape = 'u32[]', space=smem, size = 0x4, offset = 0x4, fixed_abs, tag = 'smem constant byte address 0x4 - core index']
  #allocation1 [shape = 'u32[72,128]{1,0:T(1,128)}', space=vmem, size = 0x9000, scoped, tag = 'internal scratch']
  #allocation2 [shape = 'bf16[4,18]{1,0:T(4,128)(2,1)}', space=vmem, size = 0x400, scoped, tag = 'scratch operand']
  %s0 = inlined_call_operand.vmem [shape: f32[2,4,16], index: 0, kind: input, shape index: {}]
  %s1 = inlined_call_operand.vmem [shape: bf16[2,8,4], index: 1, kind: input, shape index: {}]
  %s2 = inlined_call_operand.vmem [shape: f32[8,1], index: 2, kind: input, shape index: {}]
  %s3 = inlined_call_operand.vmem [shape: bf16[2,8,8], index: 3, kind: input, shape index: {}]
  %s4 = inlined_call_operand.vmem [shape: f32[8,1], index: 4, kind: input, shape index: {}]
  %s5 = inlined_call_operand.vmem [shape: bf16[8,4], index: 5, kind: input, shape index: {}]
  %s6 = inlined_call_operand.vmem [shape: f32[8,1], index: 6, kind: input, shape index: {}]
  %s7 = inlined_call_operand.hbm [shape: bf16[2,8,16], index: 7, kind: output, shape index: {}]
  %s8 = sld [smem:[#allocation0]]
  $region61: #{tpu_custom_call.1} parent=0
    _
  %s10 = ssub.s32 1, %s8
  %s11 = scalar_select 0, %s10, %s8
  $region1: #{tpu_custom_call.1} parent=0
    #allocation3 [shape = 'u8[4096]{0}', space=vmem, size = 0x1000, scoped, tag = 'output window, operand 0']
    #allocation4 [shape = 's32[2]{0}', space=sflag, size = 0x8, scoped, tag = 'scoped memory for tpu_custom_call.1']
    %12 = vsyncpa [#allocation4], 0
    %s13 = scalar_lea.sflag [#allocation4], 1
    %14 = vsyncpa %s13, 0
    loop: start=0, step=1, limit=4
    $region2: #{tpu_custom_call.1} parent=1 // loop_pre_header
      _
    $region3: #{tpu_custom_call.1} parent=1 // loop_header
      %s16 = sphi 0, %s20
      %p17 = scmp.ge.s32.totalorder %s16, 4
      %s23 = sphi 0, %s35
      %s24 = sphi 0, %s31
      %s25 = sphi 0, %s23
      %s26 = sphi 0, %s24
      %s27 = sphi 0, %s25
      %s28 = sphi 0, %s26
      %s40 = sphi 0, %s42
      %s43 = sphi 0, %s40
      %s44 = sphi 0, %s43
      %s60 = sphi 0, %s44
      %s64 = sphi 0, %s64
      %s66 = sphi 0, %s64
      %s67 = sphi 0, %s66
      %s81 = sphi 0, %s67
      %s85 = sphi 0, %s85
      %s87 = sphi 0, %s85
      %s88 = sphi 0, %s87
      %s102 = sphi 0, %s88
      %s106 = sphi 0, %s106
      %s108 = sphi 0, %s106
      %s109 = sphi 0, %s108
      %s123 = sphi 0, %s109
      %s127 = sphi 0, %s127
      %s129 = sphi 0, %s127
      %s130 = sphi 0, %s129
      %s144 = sphi 0, %s130
      %s148 = sphi 0, %s148
      %s150 = sphi 0, %s148
      %s151 = sphi 0, %s150
      %s165 = sphi 0, %s151
      %s169 = sphi 0, %s169
      %s171 = sphi 0, %s169
      %s172 = sphi 0, %s171
      %s186 = sphi 0, %s172
      %s194 = sphi 0, %s196
      %s197 = sphi 0, %s194
      %s198 = sphi 0, %s197
      %s214 = sphi 0, %s198
    $region4: #{tpu_custom_call.1} parent=1 // loop_header_branch
      %19 = sbr.rel (%p17) target = $region8
    $region5: #{tpu_custom_call.1} parent=1 // loop_body
      %s21 = ssub.s32 %s16, 1
      %s22 = ssub.s32 %s16, 2
      %s29 = sadd.s32 1, %s24
      %p30 = scmp.ge.s32.totalorder %s29, 1
      %s31 = scalar_select %p30, 0, %s29
      %s32 = sadd.s32 1, %s23
      %s33 = scalar_select %p30, %s32, %s23
      %p34 = scmp.ge.s32.totalorder %s33, 2
      %s35 = scalar_select %p34, 0, %s33
      %s36 = ssub.s32 %s23, %s35
      %s37 = ssub.s32 %s24, %s31
      %s38 = sor.u32 %s36, %s37
      %p39 = scmp.eq.s32.totalorder %s38, 0
      %s41 = sadd.s32 %s40, 1
      %s42 = scalar_select %p39, %s40, %s41
      %p45 = pneg %p39
      %p46 = scmp.eq.s32.totalorder %s16, 1
      %p47 = por %p45, %p46
      %p48 = scmp.ne.s32.totalorder %s40, %s43
      %p49 = scmp.eq.s32.totalorder %s16, 0
      %p50 = por %p48, %p49
      %p51 = scmp.ne.s32.totalorder %s40, %s43
      %p52 = scmp.eq.s32.totalorder %s21, 1
      %p53 = por %p51, %p52
      %p54 = scmp.ne.s32.totalorder %s43, %s44
      %p55 = scmp.eq.s32.totalorder %s21, 0
      %p56 = por %p54, %p55
      %p57 = scmp.ne.s32.totalorder %s43, %s44
      %p58 = scmp.eq.s32.totalorder %s22, 1
      %p59 = por %p57, %p58
      %p61 = scmp.ne.s32.totalorder %s44, %s60
      %p62 = scmp.eq.s32.totalorder %s22, 0
      %p63 = por %p61, %p62
      %s65 = sadd.s32 %s64, 1
      %p68 = scmp.eq.s32.totalorder %s16, 1
      %p69 = scmp.ne.s32.totalorder %s64, %s66
      %p70 = scmp.eq.s32.totalorder %s16, 0
      %p71 = por %p69, %p70
      %p72 = scmp.ne.s32.totalorder %s64, %s66
      %p73 = scmp.eq.s32.totalorder %s21, 1
      %p74 = por %p72, %p73
      %p75 = scmp.ne.s32.totalorder %s66, %s67
      %p76 = scmp.eq.s32.totalorder %s21, 0
      %p77 = por %p75, %p76
      %p78 = scmp.ne.s32.totalorder %s66, %s67
      %p79 = scmp.eq.s32.totalorder %s22, 1
      %p80 = por %p78, %p79
      %p82 = scmp.ne.s32.totalorder %s67, %s81
      %p83 = scmp.eq.s32.totalorder %s22, 0
      %p84 = por %p82, %p83
      %s86 = sadd.s32 %s85, 1
      %p89 = scmp.eq.s32.totalorder %s16, 1
      %p90 = scmp.ne.s32.totalorder %s85, %s87
      %p91 = scmp.eq.s32.totalorder %s16, 0
      %p92 = por %p90, %p91
      %p93 = scmp.ne.s32.totalorder %s85, %s87
      %p94 = scmp.eq.s32.totalorder %s21, 1
      %p95 = por %p93, %p94
      %p96 = scmp.ne.s32.totalorder %s87, %s88
      %p97 = scmp.eq.s32.totalorder %s21, 0
      %p98 = por %p96, %p97
      %p99 = scmp.ne.s32.totalorder %s87, %s88
      %p100 = scmp.eq.s32.totalorder %s22, 1
      %p101 = por %p99, %p100
      %p103 = scmp.ne.s32.totalorder %s88, %s102
      %p104 = scmp.eq.s32.totalorder %s22, 0
      %p105 = por %p103, %p104
      %s107 = sadd.s32 %s106, 1
      %p110 = scmp.eq.s32.totalorder %s16, 1
      %p111 = scmp.ne.s32.totalorder %s106, %s108
      %p112 = scmp.eq.s32.totalorder %s16, 0
      %p113 = por %p111, %p112
      %p114 = scmp.ne.s32.totalorder %s106, %s108
      %p115 = scmp.eq.s32.totalorder %s21, 1
      %p116 = por %p114, %p115
      %p117 = scmp.ne.s32.totalorder %s108, %s109
      %p118 = scmp.eq.s32.totalorder %s21, 0
      %p119 = por %p117, %p118
      %p120 = scmp.ne.s32.totalorder %s108, %s109
      %p121 = scmp.eq.s32.totalorder %s22, 1
      %p122 = por %p120, %p121
      %p124 = scmp.ne.s32.totalorder %s109, %s123
      %p125 = scmp.eq.s32.totalorder %s22, 0
      %p126 = por %p124, %p125
      %s128 = sadd.s32 %s127, 1
      %p131 = scmp.eq.s32.totalorder %s16, 1
      %p132 = scmp.ne.s32.totalorder %s127, %s129
      %p133 = scmp.eq.s32.totalorder %s16, 0
      %p134 = por %p132, %p133
      %p135 = scmp.ne.s32.totalorder %s127, %s129
      %p136 = scmp.eq.s32.totalorder %s21, 1
      %p137 = por %p135, %p136
      %p138 = scmp.ne.s32.totalorder %s129, %s130
      %p139 = scmp.eq.s32.totalorder %s21, 0
      %p140 = por %p138, %p139
      %p141 = scmp.ne.s32.totalorder %s129, %s130
      %p142 = scmp.eq.s32.totalorder %s22, 1
      %p143 = por %p141, %p142
      %p145 = scmp.ne.s32.totalorder %s130, %s144
      %p146 = scmp.eq.s32.totalorder %s22, 0
      %p147 = por %p145, %p146
      %s149 = sadd.s32 %s148, 1
      %p152 = scmp.eq.s32.totalorder %s16, 1
      %p153 = scmp.ne.s32.totalorder %s148, %s150
      %p154 = scmp.eq.s32.totalorder %s16, 0
      %p155 = por %p153, %p154
      %p156 = scmp.ne.s32.totalorder %s148, %s150
      %p157 = scmp.eq.s32.totalorder %s21, 1
      %p158 = por %p156, %p157
      %p159 = scmp.ne.s32.totalorder %s150, %s151
      %p160 = scmp.eq.s32.totalorder %s21, 0
      %p161 = por %p159, %p160
      %p162 = scmp.ne.s32.totalorder %s150, %s151
      %p163 = scmp.eq.s32.totalorder %s22, 1
      %p164 = por %p162, %p163
      %p166 = scmp.ne.s32.totalorder %s151, %s165
      %p167 = scmp.eq.s32.totalorder %s22, 0
      %p168 = por %p166, %p167
      %s170 = sadd.s32 %s169, 1
      %p173 = scmp.eq.s32.totalorder %s16, 1
      %p174 = scmp.ne.s32.totalorder %s169, %s171
      %p175 = scmp.eq.s32.totalorder %s16, 0
      %p176 = por %p174, %p175
      %p177 = scmp.ne.s32.totalorder %s169, %s171
      %p178 = scmp.eq.s32.totalorder %s21, 1
      %p179 = por %p177, %p178
      %p180 = scmp.ne.s32.totalorder %s171, %s172
      %p181 = scmp.eq.s32.totalorder %s21, 0
      %p182 = por %p180, %p181
      %p183 = scmp.ne.s32.totalorder %s171, %s172
      %p184 = scmp.eq.s32.totalorder %s22, 1
      %p185 = por %p183, %p184
      %p187 = scmp.ne.s32.totalorder %s172, %s186
      %p188 = scmp.eq.s32.totalorder %s22, 0
      %p189 = por %p187, %p188
      %s190 = ssub.s32 %s23, %s35
      %s191 = ssub.s32 %s24, %s31
      %s192 = sor.u32 %s190, %s191
      %p193 = scmp.eq.s32.totalorder %s192, 0
      %s195 = sadd.s32 %s194, 1
      %s196 = scalar_select %p193, %s194, %s195
      %p199 = pneg %p193
      %p200 = scmp.eq.s32.totalorder %s16, 1
      %p201 = por %p199, %p200
      %p202 = scmp.ne.s32.totalorder %s194, %s197
      %p203 = scmp.eq.s32.totalorder %s16, 0
      %p204 = por %p202, %p203
      %p205 = scmp.ne.s32.totalorder %s194, %s197
      %p206 = scmp.eq.s32.totalorder %s21, 1
      %p207 = por %p205, %p206
      %p208 = scmp.ne.s32.totalorder %s197, %s198
      %p209 = scmp.eq.s32.totalorder %s21, 0
      %p210 = por %p208, %p209
      %p211 = scmp.ne.s32.totalorder %s197, %s198
      %p212 = scmp.eq.s32.totalorder %s22, 1
      %p213 = por %p211, %p212
      %p215 = scmp.ne.s32.totalorder %s198, %s214
      %p216 = scmp.eq.s32.totalorder %s22, 0
      %p217 = por %p215, %p216
      %p218 = scmp.le.s32.totalorder 1, %s16
      %p219 = scmp.lt.s32.totalorder %s16, 3
      %p220 = pnand %p218, %p219
      %p221 = pneg %p220
      // Predicated region
      $region9: #{tpu_custom_call.1} parent=5 // pred_check
        _
      $region10: #{tpu_custom_call.1} parent=5 // pred_check_branch
        %223 = sbr.rel (%p220) target = $region12
      $region11: #{tpu_custom_call.1} parent=5 // pred_region
        %s224 = ssub.s32 %s16, 1
        // Predicated region
        $region13: #{tpu_custom_call.1} parent=11 // pred_check
          %p225 = pneg %p77
        $region14: #{tpu_custom_call.1} parent=11 // pred_check_branch
          %227 = sbr.rel (%p225) target = $region16
        $region15: #{tpu_custom_call.1} parent=11 // pred_region
          _
        $region16: #{tpu_custom_call.1} parent=11 // pred_fallthru
          _
        // Predicated region
        $region17: #{tpu_custom_call.1} parent=11 // pred_check
          %p228 = pneg %p98
        $region18: #{tpu_custom_call.1} parent=11 // pred_check_branch
          %230 = sbr.rel (%p228) target = $region20
        $region19: #{tpu_custom_call.1} parent=11 // pred_region
          _
        $region20: #{tpu_custom_call.1} parent=11 // pred_fallthru
          _
        // Predicated region
        $region21: #{tpu_custom_call.1} parent=11 // pred_check
          %p231 = pneg %p119
        $region22: #{tpu_custom_call.1} parent=11 // pred_check_branch
          %233 = sbr.rel (%p231) target = $region24
        $region23: #{tpu_custom_call.1} parent=11 // pred_region
          _
        $region24: #{tpu_custom_call.1} parent=11 // pred_fallthru
          _
        // Predicated region
        $region25: #{tpu_custom_call.1} parent=11 // pred_check
          %p234 = pneg %p140
        $region26: #{tpu_custom_call.1} parent=11 // pred_check_branch
          %236 = sbr.rel (%p234) target = $region28
        $region27: #{tpu_custom_call.1} parent=11 // pred_region
          _
        $region28: #{tpu_custom_call.1} parent=11 // pred_fallthru
          _
        // Predicated region
        $region29: #{tpu_custom_call.1} parent=11 // pred_check
          %p237 = pneg %p161
        $region30: #{tpu_custom_call.1} parent=11 // pred_check_branch
          %239 = sbr.rel (%p237) target = $region32
        $region31: #{tpu_custom_call.1} parent=11 // pred_region
          _
        $region32: #{tpu_custom_call.1} parent=11 // pred_fallthru
          _
        // Predicated region
        $region33: #{tpu_custom_call.1} parent=11 // pred_check
          %p240 = pneg %p182
        $region34: #{tpu_custom_call.1} parent=11 // pred_check_branch
          %242 = sbr.rel (%p240) target = $region36
        $region35: #{tpu_custom_call.1} parent=11 // pred_region
          _
        $region36: #{tpu_custom_call.1} parent=11 // pred_fallthru
          _
      $region12: #{tpu_custom_call.1} parent=5 // pred_fallthru
        _
      %p243 = scmp.lt.s32.totalorder %s16, 2
      // Predicated region
      $region37: #{tpu_custom_call.1} parent=5 // pred_check
        %p244 = pneg %p243
      $region38: #{tpu_custom_call.1} parent=5 // pred_check_branch
        %246 = sbr.rel (%p244) target = $region40
      $region39: #{tpu_custom_call.1} parent=5 // pred_region
        // Predicated region
        $region41: #{tpu_custom_call.1} parent=39 // pred_check
          %p247 = pneg %p50
        $region42: #{tpu_custom_call.1} parent=39 // pred_check_branch
          %249 = sbr.rel (%p247) target = $region44
        $region43: #{tpu_custom_call.1} parent=39 // pred_region
          %p250 = scmp.lt.s32.totalorder %s23, 1
          %s251 = scalar_select %p250, %s23, 1
          %p252 = scmp.lt.s32.totalorder %s24, 0
          %s253 = scalar_select %p252, %s24, 0
          %s254 = sadd.s32 %s253, %s251
          %s255 = smul.addr %s254, 4
          %s256 = scalar_lea.vmem %s0, %s255
        $region44: #{tpu_custom_call.1} parent=39 // pred_fallthru
          _
      $region40: #{tpu_custom_call.1} parent=5 // pred_fallthru
        _
      %p257 = scmp.le.s32.totalorder 1, %s16
      %p258 = scmp.lt.s32.totalorder %s16, 3
      %p259 = pnand %p257, %p258
      %p260 = pneg %p259
      // Predicated region
      $region45: #{tpu_custom_call.1} parent=5 // pred_check
        _
      $region46: #{tpu_custom_call.1} parent=5 // pred_check_branch
        %262 = sbr.rel (%p259) target = $region48
      $region47: #{tpu_custom_call.1} parent=5 // pred_region
        %s263 = ssub.s32 %s16, 1
        %p264 = scmp.lt.s32.totalorder %s25, 1
        %s265 = scalar_select %p264, %s25, 1
        %p266 = scmp.lt.s32.totalorder %s26, 0
        %s267 = scalar_select %p266, %s26, 0
        %s268 = sadd.s32 %s267, %s265
        %s269 = smul.addr %s268, 4
        %s270 = scalar_lea.vmem %s0, %s269
        %p271 = pneg %p56
        %p272 = pneg %p53
        %p273 = pneg %p77
        %p274 = pneg %p74
        %p275 = pneg %p98
        %p276 = pneg %p95
        %p277 = pneg %p119
        %p278 = pneg %p116
        %p279 = pneg %p140
        %p280 = pneg %p137
        %p281 = pneg %p161
        %p282 = pneg %p158
        %p283 = pneg %p182
        %p284 = pneg %p179
        %p285 = pneg %p210
        %p286 = pneg %p207
        %s287 = sand.u32 %s197, 1
        %s288 = scalar_lea.sflag [#allocation4], %s287
        %s289 = sand.u32 %s197, 1
        %s290 = smul.addr %s289, 4
        %s291 = scalar_lea.vmem [#allocation3], %s290
        %p292 = scmp.lt.s32.totalorder %s25, 1
        %s293 = scalar_select %p292, %s25, 1
        %p294 = scmp.lt.s32.totalorder %s26, 0
        %s295 = scalar_select %p294, %s26, 0
        %s296 = sadd.s32 %s295, %s293
        %s297 = smul.addr %s296, 4
        %s298 = scalar_lea.vmem %s0, %s297
        %v300 = vld [vmem:[%s298] sm:$0xf]
        %v301 = vpack.c.bf16 %v300, %v300
        %vm302 = vcmask 9216
        %303 = vst.msk [vmem:[#allocation2] sm:$0x3] %vm302, 0
        %v305 = vrot.slane %v301, 2
        %vm306 = vcmask 1041408
        %v309 = vsel %vm306, %v301, %v305
        %311 = vrot.lane.b32.xlu0 %v309, 2
        %v312 = vpop.permute.xlu0 %311
        %vm314 = vcmask 140304
        %315 = vst.msk [vmem:[#allocation2] sm:$0x3] %vm314, %v312
        %v316 = vld [vmem:[%s1] sm:$0xf]
        %v317 = vld [vmem:[#allocation2] sm:$0x3]
        %s318 = scalar_lea.vmem %s1, 4
        %v319 = vld [vmem:[%s318] sm:$0xf]
        %321 = vst [vmem:[#allocation1] ss:$4 sm:$0xff] %v317
        %v322 = vld.sshfl [vmem:[#allocation1] sm:$0xff pattern:$0x73625140]
        %324 = vrot.lane.b32.xlu0 %v322, 127
        %v325 = vpop.permute.xlu0 %324
        %vm326 = vcmask 31744
        %v328 = vsel %vm326, %v319, 0
        %v331 = vsel %vm306, %v325, 0
        %333 = vmatpush.bf16.msra.mxu0 0
        %334 = vmatpush.bf16.msra.mxu0 0
        %335 = vmatpush.bf16.msra.mxu0 0
        %336 = vmatpush.bf16.msra.mxu0 0
        %337 = vmatpush.bf16.msra.mxu0 0
        %338 = vmatpush.bf16.msra.mxu0 0
        %339 = vmatpush.bf16.msra.mxu0 0
        %340 = vmatpush.bf16.msra.mxu0 %v331
        %341 = vmatmul.bf16.gmra.mxu0 %v328
        %v342 = vpop.f32.mrf.mxu0
        %v343 = vadd.f32 0.0, %v342
        %v344 = vpop.f32.mrf.mxu0
        %345 = vdwg.mxu0
        %v347 = vsel %vm326, %v316, 0
        %v349 = vsel %vm306, %v317, 0
        %351 = vmatpush.bf16.msra.mxu0 0
        %352 = vmatpush.bf16.msra.mxu0 0
        %353 = vmatpush.bf16.msra.mxu0 0
        %354 = vmatpush.bf16.msra.mxu0 0
        %355 = vmatpush.bf16.msra.mxu0 0
        %356 = vmatpush.bf16.msra.mxu0 0
        %357 = vmatpush.bf16.msra.mxu0 0
        %358 = vmatpush.bf16.msra.mxu0 %v349
        %359 = vmatmul.bf16.gmra.mxu0 %v347
        %v360 = vpop.f32.mrf.mxu0
        %v361 = vadd.f32 %v343, %v360
        %v362 = vpop.f32.mrf.mxu0
        %363 = vdwg.mxu0
        %v364 = vld [vmem:[%s2] sm:$0xff]
        %366 = vset.pattern.permute.xlu0 0
        %367 = vperm.xlu0 %366, %v364
        %v368 = vpop.permute.xlu0 %367
        %v370 = vadd.f32 %v361, %v368
        %v371 = vmax.f32 %v370, 0.0
        %v372 = vlaneseq
        %v373 = vand.u32 %v372, 127
        %vm374 = vcmp.ge.s32.totalorder %v373, 1
        %v375 = vsel %vm374, %v371, 0.0
        %v376 = vpack.c.bf16 %v375, %v375
        %v377 = vld [vmem:[%s3] sm:$0xf]
        %s378 = scalar_lea.vmem %s3, 4
        %v379 = vld [vmem:[%s378] sm:$0xf]
        %v381 = vunpack.c.l.b16 %v376
        %v382 = vpack.c.b16 %v381, %v381
        %383 = vrot.lane.b32.xlu0 %v382, 127
        %v384 = vpop.permute.xlu0 %383
        %vm385 = vcmask 64512
        %v387 = vsel %vm385, %v379, 0
        %vm389 = vcmask 1043456
        %v391 = vsel %vm389, %v384, 0
        %393 = vmatpush.bf16.msra.mxu0 0
        %394 = vmatpush.bf16.msra.mxu0 0
        %395 = vmatpush.bf16.msra.mxu0 0
        %396 = vmatpush.bf16.msra.mxu0 0
        %397 = vmatpush.bf16.msra.mxu0 0
        %398 = vmatpush.bf16.msra.mxu0 0
        %399 = vmatpush.bf16.msra.mxu0 0
        %400 = vmatpush.bf16.msra.mxu0 %v391
        %401 = vmatmul.bf16.gmra.mxu0 %v387
        %v402 = vpop.f32.mrf.mxu0
        %v403 = vadd.f32 0.0, %v402
        %v404 = vpop.f32.mrf.mxu0
        %405 = vdwg.mxu0
        %v407 = vsel %vm385, %v377, 0
        %v410 = vsel %vm389, %v376, 0
        %412 = vmatpush.bf16.msra.mxu0 0
        %413 = vmatpush.bf16.msra.mxu0 0
        %414 = vmatpush.bf16.msra.mxu0 0
        %415 = vmatpush.bf16.msra.mxu0 0
        %416 = vmatpush.bf16.msra.mxu0 0
        %417 = vmatpush.bf16.msra.mxu0 0
        %418 = vmatpush.bf16.msra.mxu0 0
        %419 = vmatpush.bf16.msra.mxu0 %v410
        %420 = vmatmul.bf16.gmra.mxu0 %v407
        %v421 = vpop.f32.mrf.mxu0
        %v422 = vadd.f32 %v403, %v421
        %v423 = vpop.f32.mrf.mxu0
        %424 = vdwg.mxu0
        %v425 = vld [vmem:[%s4] sm:$0xff]
        %427 = vset.pattern.permute.xlu0 0
        %428 = vperm.xlu0 %427, %v425
        %v429 = vpop.permute.xlu0 %428
        %v431 = vadd.f32 %v422, %v429
        %v432 = vmax.f32 %v431, 0.0
        %v433 = vld [vmem:[%s5] sm:$0xf]
        %v434 = vld [vmem:[%s6] sm:$0xff]
        %436 = vset.pattern.permute.xlu0 0
        %437 = vperm.xlu0 %436, %v434
        %v438 = vpop.permute.xlu0 %437
        %v441 = vsel %vm326, %v433, 0
        %v443 = vsel %vm306, %v301, 0
        %445 = vmatpush.bf16.msra.mxu0 0
        %446 = vmatpush.bf16.msra.mxu0 0
        %447 = vmatpush.bf16.msra.mxu0 0
        %448 = vmatpush.bf16.msra.mxu0 0
        %449 = vmatpush.bf16.msra.mxu0 0
        %450 = vmatpush.bf16.msra.mxu0 0
        %451 = vmatpush.bf16.msra.mxu0 0
        %452 = vmatpush.bf16.msra.mxu0 %v443
        %453 = vmatmul.bf16.gmra.mxu0 %v441
        %v454 = vpop.f32.mrf.mxu0
        %v455 = vadd.f32 %v438, %v454
        %v456 = vpop.f32.mrf.mxu0
        %457 = vdwg.mxu0
        %v458 = vadd.f32 %v432, %v455
        %v459 = vmax.f32 %v458, 0.0
        %v460 = vpack.c.bf16 %v459, %v459
        %vm461 = vcmask 125952
        %462 = vst.msk [vmem:[%s291] sm:$0xf] %vm461, %v460
        %s463 = sand.u32 %s197, 1
        %s464 = scalar_lea.sflag [#allocation4], %s463
        %s465 = sand.u32 %s197, 1
        %s466 = smul.addr %s465, 4
        %s467 = scalar_lea.vmem [#allocation3], %s466
        // Predicated region
        $region49: #{tpu_custom_call.1} parent=47 // pred_check
          %p468 = pneg %p207
        $region50: #{tpu_custom_call.1} parent=47 // pred_check_branch
          %470 = sbr.rel (%p468) target = $region52
        $region51: #{tpu_custom_call.1} parent=47 // pred_region
          %472 = vsyncadd %s464, 0
          %s473 = sadd.s32 %s26, %s25
          %s474 = smul.addr %s473, 4
          %s475 = scalar_lea.hbm %s7, %s474
          %s477 = sshll.u32 %s467, 4
          %s478 = int_to_ptr.vmem [resolvable:$true] %s477
          %s479 = sshll.u32 %s475, 4
          %s480 = int_to_ptr.hbm [resolvable:$true] %s479
          %482 = dma.vmem_to_hbm [thread:$0]  %s478, 64, %s480, %s464
        $region52: #{tpu_custom_call.1} parent=47 // pred_fallthru
          _
      $region48: #{tpu_custom_call.1} parent=5 // pred_fallthru
        _
      %p483 = scmp.le.s32.totalorder 2, %s16
      // Predicated region
      $region53: #{tpu_custom_call.1} parent=5 // pred_check
        %p484 = pneg %p483
      $region54: #{tpu_custom_call.1} parent=5 // pred_check_branch
        %486 = sbr.rel (%p484) target = $region56
      $region55: #{tpu_custom_call.1} parent=5 // pred_region
        %s487 = ssub.s32 %s16, 2
        // Predicated region
        $region57: #{tpu_custom_call.1} parent=55 // pred_check
          %p488 = pneg %p213
        $region58: #{tpu_custom_call.1} parent=55 // pred_check_branch
          %490 = sbr.rel (%p488) target = $region60
        $region59: #{tpu_custom_call.1} parent=55 // pred_region
          %s491 = sand.u32 %s198, 1
          %s492 = scalar_lea.sflag [#allocation4], %s491
          %s493 = sand.u32 %s198, 1
          %s494 = smul.addr %s493, 4
          %s495 = scalar_lea.vmem [#allocation3], %s494
          %497 = dma.done %s492, 64
        $region60: #{tpu_custom_call.1} parent=55 // pred_fallthru
          _
      $region56: #{tpu_custom_call.1} parent=5 // pred_fallthru
        _
    $region6: #{tpu_custom_call.1} parent=1 // loop_footer
      %s20 = sadd.s32 1, %s16
    $region7: #{tpu_custom_call.1} parent=1 // loop_footer_branch
      %15 = sbr.rel target = $region3
    $region8: #{tpu_custom_call.1} parent=1 // loop_exit
      _
    %498 = vsyncpa [#allocation4], 1
    %s499 = scalar_lea.sflag [#allocation4], 1
    %500 = vsyncpa %s499, 1

</llo_original>
